<compile_context>
chip_gen: v5e
topology: v5e:2x2
jax: 0.10.0
libtpu: 0.0.40
codegen_flags: <defaults>
</compile_context>

<pallas_src>
import jax
import jax.numpy as jnp
from jax.experimental import pallas as pl
from jax.experimental.pallas import tpu as pltpu


def _round_up(x, m):
    return ((x + m - 1) // m) * m


def _chip_vmem_limit_bytes():
    """Chip-aware VMEM limit: big tiles on 128 MiB chips, conservative on 64 MiB (v7x/unknown)."""
    try:
        kind = jax.devices()[0].device_kind.lower()
    except Exception:
        kind = ""
    if ("v5" in kind) or ("v6" in kind):
        return 100 * 1024 * 1024
    return 48 * 1024 * 1024


def _vmem_footprint(tm, tk, in_pad, hid_pad, out_pad):
    """Worst-case (double-buffered blocks + scratch) VMEM bytes of the two pallas_calls."""
    l1 = (2 * tm * tk * 1              # A tile, int8
          + 2 * tk * in_pad * 2        # xn tile, bf16
          + 2 * tm * 1 * 4             # norm rows, f32
          + 2 * in_pad * hid_pad * 2   # W1, bf16
          + 2 * 1 * hid_pad * 4        # b1, f32
          + 2 * hid_pad * out_pad * 2  # W2, bf16
          + 2 * tm * out_pad * 2       # T output tile, bf16
          + tm * in_pad * 4)           # accumulator scratch, f32
    l2 = (2 * tm * tk * 1              # A tile, int8
          + 2 * tk * out_pad * 2       # T tile, bf16
          + 2 * tm * 1 * 4             # norm rows, f32
          + 2 * 1 * out_pad * 4        # b2, f32
          + 2 * tm * out_pad * 4       # output tile, f32
          + tm * out_pad * 4)          # accumulator scratch, f32
    return max(l1, l2)


def _choose_tiles(n, in_pad, hid_pad, out_pad, budget_bytes):
    """Largest (tm, tk) pair that fits the resident-aware budget; floors at 128 (MXU-sized)."""
    n128 = _round_up(n, 128)
    tm_cands = [t for t in (512, 256, 128) if t <= n128] or [128]
    tk_cands = [t for t in (2048, 1024, 512, 256, 128) if t <= n128] or [128]
    for tm in tm_cands:
        for tk in tk_cands:
            if _vmem_footprint(tm, tk, in_pad, hid_pad, out_pad) <= budget_bytes:
                return tm, tk
    return 128, 128


def gcn_layer1_kernel(a_ref, xn_ref, norm_ref, w1_ref, b1_ref, w2_ref, t_ref, acc_ref):
    # a_ref:    [tm, tk]      int8 adjacency tile (0/1)
    # xn_ref:   [tk, in_pad]  bf16 src-normalized features (norm * X), K-streamed
    # norm_ref: [tm, 1]       f32 dst norm rows
    # acc_ref:  [tm, in_pad]  f32 accumulator scratch (persists across k)
    k = pl.program_id(1)

    @pl.when(k == 0)
    def _():
        acc_ref[...] = jnp.zeros_like(acc_ref)

    # int8 -> f32 -> bf16 two-step upcast (safe lowering path); hides under the A DMA.
    a = a_ref[...].astype(jnp.float32).astype(jnp.bfloat16)
    acc_ref[...] += jnp.dot(a, xn_ref[...], preferred_element_type=jnp.float32)

    @pl.when(k == pl.num_programs(1) - 1)
    def _():
        agg = (norm_ref[...] * acc_ref[...]).astype(jnp.bfloat16)          # dst norm, bf16 for MXU
        h = jnp.dot(agg, w1_ref[...], preferred_element_type=jnp.float32) + b1_ref[...]
        h = jnp.maximum(h, 0.0)                                             # ReLU
        # TODO(synk): Dropout(p=0.5) is identity in eval mode; training-mode dropout would need
        # pltpu.prng_seed/prng_random_bits and is intentionally omitted.
        hn = (norm_ref[...] * h).astype(jnp.bfloat16)                       # weight-first layer 2
        t = jnp.dot(hn, w2_ref[...], preferred_element_type=jnp.float32)    # T = (norm*H1) @ W2
        t_ref[...] = t.astype(t_ref.dtype)                                  # bf16, 128-lane dense


def gcn_layer2_kernel(a_ref, t_ref, norm_ref, b2_ref, o_ref, acc_ref):
    # Weight-first layer 2 (part 2): O = norm * (A @ T) + b2  — pure A streaming with K accumulation.
    k = pl.program_id(1)

    @pl.when(k == 0)
    def _():
        acc_ref[...] = jnp.zeros_like(acc_ref)

    a = a_ref[...].astype(jnp.float32).astype(jnp.bfloat16)
    acc_ref[...] += jnp.dot(a, t_ref[...], preferred_element_type=jnp.float32)

    @pl.when(k == pl.num_programs(1) - 1)
    def _():
        o_ref[...] = norm_ref[...] * acc_ref[...] + b2_ref[...]


def gcn_forward(adj, x, w1, b1, w2, b2):
    n, in_size = x.shape
    hid_size = w1.shape[1]
    out_size = w2.shape[1]

    # 128-lane-dense feature widths (zero padding is exactly neutral through the linear ops + ReLU).
    in_pad = _round_up(in_size, 128)
    hid_pad = _round_up(hid_size, 128)
    out_pad = _round_up(out_size, 128)

    adj = adj.astype(jnp.float32)
    # Symmetric normalization D^{-1/2}, degrees clamped to >= 1 (DGL norm='both').
    deg = jnp.maximum(jnp.sum(adj, axis=1, keepdims=True), 1.0)
    norm = jax.lax.rsqrt(deg)                                    # [N, 1] f32

    vmem_limit = _chip_vmem_limit_bytes()
    tm, tk = _choose_tiles(n, in_pad, hid_pad, out_pad, vmem_limit - (8 << 20))
    n_pad = _round_up(n, max(tm, tk))
    grid = (n_pad // tm, n_pad // tk)

    # int8 adjacency (entries 0/1 -> exact): halves the dominant N^2 HBM stream. Zero row/col padding.
    a_i8 = jnp.zeros((n_pad, n_pad), jnp.int8).at[:n, :n].set(adj.astype(jnp.int8))
    norm_p = jnp.ones((n_pad, 1), jnp.float32).at[:n, :].set(norm)
    xn = jnp.zeros((n_pad, in_pad), jnp.bfloat16).at[:n, :in_size].set((norm * x).astype(jnp.bfloat16))

    # bf16 weights (MXU operands), f32 biases (VPU), all zero-padded to lane-dense widths.
    w1p = jnp.zeros((in_pad, hid_pad), jnp.bfloat16).at[:in_size, :hid_size].set(w1.astype(jnp.bfloat16))
    b1p = jnp.zeros((1, hid_pad), jnp.float32).at[:, :hid_size].set(
        b1.reshape(1, hid_size).astype(jnp.float32))
    w2p = jnp.zeros((hid_pad, out_pad), jnp.bfloat16).at[:hid_size, :out_size].set(w2.astype(jnp.bfloat16))
    b2p = jnp.zeros((1, out_pad), jnp.float32).at[:, :out_size].set(
        b2.reshape(1, out_size).astype(jnp.float32))

    cparams = pltpu.CompilerParams(
        dimension_semantics=("parallel", "arbitrary"),   # rows independent (megacore), K is reduction
        vmem_limit_bytes=vmem_limit,
    )

    # Pass 1: T = (norm * relu(norm*(A @ (norm*X)) @ W1 + b1)) @ W2   -> bf16 [n_pad, out_pad]
    t = pl.pallas_call(
        gcn_layer1_kernel,
        out_shape=jax.ShapeDtypeStruct((n_pad, out_pad), jnp.bfloat16),
        grid_spec=pltpu.PrefetchScalarGridSpec(
            num_scalar_prefetch=0,
            grid=grid,
            in_specs=[
                pl.BlockSpec((tm, tk), lambda i, k: (i, k)),           # A tile (streamed)
                pl.BlockSpec((tk, in_pad), lambda i, k: (k, 0)),       # norm*X tile (K-streamed)
                pl.BlockSpec((tm, 1), lambda i, k: (i, 0)),            # norm rows
                pl.BlockSpec((in_pad, hid_pad), lambda i, k: (0, 0)),  # W1
                pl.BlockSpec((1, hid_pad), lambda i, k: (0, 0)),       # b1
                pl.BlockSpec((hid_pad, out_pad), lambda i, k: (0, 0)), # W2
            ],
            out_specs=pl.BlockSpec((tm, out_pad), lambda i, k: (i, 0)),
            scratch_shapes=[pltpu.VMEM((tm, in_pad), jnp.float32)],
        ),
        compiler_params=cparams,
    )(a_i8, xn, norm_p, w1p, b1p, w2p)

    # Pass 2: O = norm * (A @ T) + b2   (only A and T tiles streamed)
    out_pad_arr = pl.pallas_call(
        gcn_layer2_kernel,
        out_shape=jax.ShapeDtypeStruct((n_pad, out_pad), jnp.float32),
        grid_spec=pltpu.PrefetchScalarGridSpec(
            num_scalar_prefetch=0,
            grid=grid,
            in_specs=[
                pl.BlockSpec((tm, tk), lambda i, k: (i, k)),           # A tile (streamed)
                pl.BlockSpec((tk, out_pad), lambda i, k: (k, 0)),      # T tile (K-streamed)
                pl.BlockSpec((tm, 1), lambda i, k: (i, 0)),            # norm rows
                pl.BlockSpec((1, out_pad), lambda i, k: (0, 0)),       # b2
            ],
            out_specs=pl.BlockSpec((tm, out_pad), lambda i, k: (i, 0)),
            scratch_shapes=[pltpu.VMEM((tm, out_pad), jnp.float32)],
        ),
        compiler_params=cparams,
    )(a_i8, t, norm_p, b2p)

    return out_pad_arr[:n, :out_size]


def reference_gcn(adj, x, w1, b1, w2, b2):
    deg = jnp.maximum(adj.sum(axis=1, keepdims=True), 1.0)
    norm = 1.0 / jnp.sqrt(deg)
    h = norm * (adj @ (norm * x))
    h = jnp.maximum(h @ w1 + b1, 0.0)
    h2 = norm * (adj @ (norm * h))
    return h2 @ w2 + b2


if __name__ == "__main__":
    key = jax.random.PRNGKey(0)
    n_nodes, in_size, hid_size, out_size = 32, 16, 32, 8

    k_adj, k_x, k_w1, k_w2 = jax.random.split(key, 4)

    # Random undirected graph (symmetric 0/1 adjacency, no self loops).
    upper = (jax.random.uniform(k_adj, (n_nodes, n_nodes)) < 0.2).astype(jnp.float32)
    upper = jnp.triu(upper, k=1)
    adj = upper + upper.T

    x = jax.random.normal(k_x, (n_nodes, in_size), dtype=jnp.float32)

    # Deterministic parameter init (xavier-uniform-style weights, zero biases,
    # matching nn.Linear/GraphConv parameter shapes).
    lim1 = (6.0 / (in_size + hid_size)) ** 0.5
    w1 = jax.random.uniform(k_w1, (in_size, hid_size), minval=-lim1, maxval=lim1,
                            dtype=jnp.float32)
    b1 = jnp.zeros((1, hid_size), dtype=jnp.float32)
    lim2 = (6.0 / (hid_size + out_size)) ** 0.5
    w2 = jax.random.uniform(k_w2, (hid_size, out_size), minval=-lim2, maxval=lim2,
                            dtype=jnp.float32)
    b2 = jnp.zeros((1, out_size), dtype=jnp.float32)

    out = gcn_forward(adj, x, w1, b1, w2, b2)
    out = jax.block_until_ready(out)

    ref = reference_gcn(adj, x, w1, b1, w2, b2)
    assert out.shape == (n_nodes, out_size)
    # bf16 MXU operands (with f32 accumulation) introduce ~1e-3..1e-2 error vs the f32 reference.
    assert jnp.allclose(out, ref, atol=5e-2, rtol=5e-2), float(jnp.max(jnp.abs(out - ref)))

    print("KERNEL_OK")
</pallas_src>

<mosaic_0001>
module attributes {stable_mosaic.version = 11 : i64} {
  func.func @gcn_layer1_kernel(%arg0: i32, %arg1: i32, %arg2: memref<128x128xi8, #tpu.memory_space<vmem>>, %arg3: memref<128x128xbf16, #tpu.memory_space<vmem>>, %arg4: memref<128x1xf32, #tpu.memory_space<vmem>>, %arg5: memref<128x128xbf16, #tpu.memory_space<vmem>>, %arg6: memref<1x128xf32, #tpu.memory_space<vmem>>, %arg7: memref<128x128xbf16, #tpu.memory_space<vmem>>, %arg8: memref<128x128xbf16, #tpu.memory_space<vmem>>, %arg9: memref<128x128xf32, #tpu.memory_space<vmem>>) attributes {dimension_semantics = [#tpu.dimension_semantics<parallel>, #tpu.dimension_semantics<arbitrary>], iteration_bounds = array<i64: 1, 1>, scalar_prefetch = 0 : i64, scratch_operands = 1 : i64, tpu.core_type = #tpu.core_type<tc>, window_params = [{transform_indices = @transform_0, window_bounds = array<i64: 128, 128>}, {transform_indices = @transform_1, window_bounds = array<i64: 128, 128>}, {transform_indices = @transform_2, window_bounds = array<i64: 128, 1>}, {pipeline_mode = #tpu.pipeline_mode<synchronous>, transform_indices = @transform_3, window_bounds = array<i64: 128, 128>}, {pipeline_mode = #tpu.pipeline_mode<synchronous>, transform_indices = @transform_4, window_bounds = array<i64: 1, 128>}, {pipeline_mode = #tpu.pipeline_mode<synchronous>, transform_indices = @transform_5, window_bounds = array<i64: 128, 128>}, {transform_indices = @transform_6, window_bounds = array<i64: 128, 128>}]} {
    %c0_i32 = arith.constant 0 : i32
    %0 = arith.cmpi eq, %arg1, %c0_i32 : i32
    %1 = arith.extui %0 : i1 to i32
    %c0_i32_0 = arith.constant 0 : i32
    %2 = arith.cmpi ne, %1, %c0_i32_0 : i32
    scf.if %2 {
      %cst_10 = arith.constant 0.000000e+00 : f32
      %14 = vector.broadcast %cst_10 : f32 to vector<128x128xf32>
      %c0_11 = arith.constant 0 : index
      %c0_12 = arith.constant 0 : index
      %15 = vector.load %arg9[%c0_11, %c0_12] : memref<128x128xf32, #tpu.memory_space<vmem>>, vector<128x128xf32>
      tpu.vector_store %arg9[%c0_11, %c0_12], %14 {strides = array<i32>} : memref<128x128xf32, #tpu.memory_space<vmem>>, vector<128x128xf32>,
    } else {
    }
    %c0 = arith.constant 0 : index
    %c0_1 = arith.constant 0 : index
    %3 = vector.load %arg2[%c0, %c0_1] : memref<128x128xi8, #tpu.memory_space<vmem>>, vector<128x128xi8>
    %4 = arith.sitofp %3 : vector<128x128xi8> to vector<128x128xf32>
    %5 = arith.truncf %4 : vector<128x128xf32> to vector<128x128xbf16>
    %c0_2 = arith.constant 0 : index
    %c0_3 = arith.constant 0 : index
    %6 = vector.load %arg9[%c0_2, %c0_3] : memref<128x128xf32, #tpu.memory_space<vmem>>, vector<128x128xf32>
    %c0_4 = arith.constant 0 : index
    %c0_5 = arith.constant 0 : index
    %7 = vector.load %arg3[%c0_4, %c0_5] : memref<128x128xbf16, #tpu.memory_space<vmem>>, vector<128x128xbf16>
    %cst = arith.constant dense<0.000000e+00> : vector<128x128xf32>
    %8 = tpu.matmul %5, %7, %cst {dimension_numbers = #tpu.dot_dimension_numbers<[1], [0], [0], [1], [0, 0, 1, 1], [], []>} : vector<128x128xbf16>, vector<128x128xbf16>, vector<128x128xf32> -> vector<128x128xf32>
    %9 = arith.addf %6, %8 : vector<128x128xf32>
    %c0_6 = arith.constant 0 : index
    %c0_7 = arith.constant 0 : index
    %10 = vector.load %arg9[%c0_6, %c0_7] : memref<128x128xf32, #tpu.memory_space<vmem>>, vector<128x128xf32>
    tpu.vector_store %arg9[%c0_6, %c0_7], %9 {strides = array<i32>} : memref<128x128xf32, #tpu.memory_space<vmem>>, vector<128x128xf32>,
    %c0_i32_8 = arith.constant 0 : i32
    %11 = arith.cmpi eq, %arg1, %c0_i32_8 : i32
    %12 = arith.extui %11 : i1 to i32
    %c0_i32_9 = arith.constant 0 : i32
    %13 = arith.cmpi ne, %12, %c0_i32_9 : i32
    scf.if %13 {
      %c0_10 = arith.constant 0 : index
      %c0_11 = arith.constant 0 : index
      %14 = vector.load %arg4[%c0_10, %c0_11] : memref<128x1xf32, #tpu.memory_space<vmem>>, vector<128x1xf32>
      %c0_12 = arith.constant 0 : index
      %c0_13 = arith.constant 0 : index
      %15 = vector.load %arg9[%c0_12, %c0_13] : memref<128x128xf32, #tpu.memory_space<vmem>>, vector<128x128xf32>
      %16 = vector.broadcast %14 : vector<128x1xf32> to vector<128x128xf32>
      %17 = arith.mulf %16, %15 : vector<128x128xf32>
      %18 = arith.truncf %17 : vector<128x128xf32> to vector<128x128xbf16>
      %c0_14 = arith.constant 0 : index
      %c0_15 = arith.constant 0 : index
      %19 = vector.load %arg5[%c0_14, %c0_15] : memref<128x128xbf16, #tpu.memory_space<vmem>>, vector<128x128xbf16>
      %cst_16 = arith.constant dense<0.000000e+00> : vector<128x128xf32>
      %20 = tpu.matmul %18, %19, %cst_16 {dimension_numbers = #tpu.dot_dimension_numbers<[1], [0], [0], [1], [0, 0, 1, 1], [], []>} : vector<128x128xbf16>, vector<128x128xbf16>, vector<128x128xf32> -> vector<128x128xf32>
      %c0_17 = arith.constant 0 : index
      %c0_18 = arith.constant 0 : index
      %21 = vector.load %arg6[%c0_17, %c0_18] : memref<1x128xf32, #tpu.memory_space<vmem>>, vector<1x128xf32>
      %22 = vector.broadcast %21 : vector<1x128xf32> to vector<128x128xf32>
      %23 = arith.addf %20, %22 : vector<128x128xf32>
      %cst_19 = arith.constant 0.000000e+00 : f32
      %24 = vector.broadcast %cst_19 : f32 to vector<128x128xf32>
      %25 = arith.maximumf %23, %24 : vector<128x128xf32>
      %c0_20 = arith.constant 0 : index
      %c0_21 = arith.constant 0 : index
      %26 = vector.load %arg4[%c0_20, %c0_21] : memref<128x1xf32, #tpu.memory_space<vmem>>, vector<128x1xf32>
      %27 = vector.broadcast %26 : vector<128x1xf32> to vector<128x128xf32>
      %28 = arith.mulf %27, %25 : vector<128x128xf32>
      %29 = arith.truncf %28 : vector<128x128xf32> to vector<128x128xbf16>
      %c0_22 = arith.constant 0 : index
      %c0_23 = arith.constant 0 : index
      %30 = vector.load %arg7[%c0_22, %c0_23] : memref<128x128xbf16, #tpu.memory_space<vmem>>, vector<128x128xbf16>
      %cst_24 = arith.constant dense<0.000000e+00> : vector<128x128xf32>
      %31 = tpu.matmul %29, %30, %cst_24 {dimension_numbers = #tpu.dot_dimension_numbers<[1], [0], [0], [1], [0, 0, 1, 1], [], []>} : vector<128x128xbf16>, vector<128x128xbf16>, vector<128x128xf32> -> vector<128x128xf32>
      %32 = arith.truncf %31 : vector<128x128xf32> to vector<128x128xbf16>
      %c0_25 = arith.constant 0 : index
      %c0_26 = arith.constant 0 : index
      %33 = vector.load %arg8[%c0_25, %c0_26] : memref<128x128xbf16, #tpu.memory_space<vmem>>, vector<128x128xbf16>
      tpu.vector_store %arg8[%c0_25, %c0_26], %32 {strides = array<i32>} : memref<128x128xbf16, #tpu.memory_space<vmem>>, vector<128x128xbf16>,
    } else {
    }
    return
  }
  func.func @transform_0(%arg0: i32, %arg1: i32) -> (i32, i32) {
    %c0_i32 = arith.constant 0 : i32
    return %arg0, %arg1 : i32, i32
  }
  func.func @transform_1(%arg0: i32, %arg1: i32) -> (i32, i32) {
    %c0_i32 = arith.constant 0 : i32
    %c0_i32_0 = arith.constant 0 : i32
    return %arg1, %c0_i32 : i32, i32
  }
  func.func @transform_2(%arg0: i32, %arg1: i32) -> (i32, i32) {
    %c0_i32 = arith.constant 0 : i32
    %c0_i32_0 = arith.constant 0 : i32
    return %arg0, %c0_i32 : i32, i32
  }
  func.func @transform_3(%arg0: i32, %arg1: i32) -> (i32, i32) {
    %c0_i32 = arith.constant 0 : i32
    %c0_i32_0 = arith.constant 0 : i32
    %c0_i32_1 = arith.constant 0 : i32
    return %c0_i32, %c0_i32_0 : i32, i32
  }
  func.func @transform_4(%arg0: i32, %arg1: i32) -> (i32, i32) {
    %c0_i32 = arith.constant 0 : i32
    %c0_i32_0 = arith.constant 0 : i32
    %c0_i32_1 = arith.constant 0 : i32
    return %c0_i32, %c0_i32_0 : i32, i32
  }
  func.func @transform_5(%arg0: i32, %arg1: i32) -> (i32, i32) {
    %c0_i32 = arith.constant 0 : i32
    %c0_i32_0 = arith.constant 0 : i32
    %c0_i32_1 = arith.constant 0 : i32
    return %c0_i32, %c0_i32_0 : i32, i32
  }
  func.func @transform_6(%arg0: i32, %arg1: i32) -> (i32, i32) {
    %c0_i32 = arith.constant 0 : i32
    %c0_i32_0 = arith.constant 0 : i32
    return %arg0, %c0_i32 : i32, i32
  }
}

</mosaic_0001>

<llo_original>
// kernel: tpu_custom_call.1
$region0: #{tpu_custom_call.1}
  #allocation0 [shape = 'u32[]', space=smem, size = 0x4, offset = 0x4, fixed_abs, tag = 'smem constant byte address 0x4 - core index']
  #allocation1 [shape = 'u32[72,128]{1,0:T(1,128)}', space=vmem, size = 0x9000, scoped, tag = 'internal scratch']
  #allocation2 [shape = 'f32[128,128]{1,0:T(8,128)}', space=vmem, size = 0x10000, scoped, tag = 'scratch operand']
  %s0 = inlined_call_operand.hbm [shape: s8[128,128], index: 0, kind: input, shape index: {}]
  %s1 = inlined_call_operand.vmem [shape: bf16[128,128], index: 1, kind: input, shape index: {}]
  %s2 = inlined_call_operand.vmem [shape: f32[128,1], index: 2, kind: input, shape index: {}]
  %s3 = inlined_call_operand.vmem [shape: bf16[128,128], index: 3, kind: input, shape index: {}]
  %s4 = inlined_call_operand.vmem [shape: f32[1,128], index: 4, kind: input, shape index: {}]
  %s5 = inlined_call_operand.hbm [shape: bf16[128,128], index: 5, kind: input, shape index: {}]
  %s6 = inlined_call_operand.hbm [shape: bf16[128,128], index: 6, kind: output, shape index: {}]
  %s7 = sld [smem:[#allocation0]]
  $region50: #{tpu_custom_call.1} parent=0
    _
  %s9 = ssub.s32 1, %s7
  %s10 = scalar_select 0, %s9, %s7
  $region1: #{tpu_custom_call.1} parent=0
    #allocation3 [shape = 'u8[16384]{0}', space=vmem, size = 0x4000, scoped, tag = 'input window, operand 0, single buffered']
    #allocation4 [shape = 's32[1]{0}', space=sflag, size = 0x4, scoped, tag = 'scoped memory for tpu_custom_call.1']
    #allocation5 [shape = 's32[1]{0}', space=sflag, size = 0x4, scoped, tag = 'scoped memory for tpu_custom_call.1']
    #allocation6 [shape = 'u8[32768]{0}', space=vmem, size = 0x8000, scoped, tag = 'input window, operand 5, single buffered']
    #allocation7 [shape = 's32[1]{0}', space=sflag, size = 0x4, scoped, tag = 'scoped memory for tpu_custom_call.1']
    #allocation8 [shape = 'u8[32768]{0}', space=vmem, size = 0x8000, scoped, tag = 'output window, operand 0, single buffered']
    %11 = vsyncpa [#allocation4], 0
    %12 = vsyncpa [#allocation7], 0
    %13 = vsyncpa [#allocation5], 0
    // Predicated region
    $region2: #{tpu_custom_call.1} parent=1 // pred_check
      _
    $region3: #{tpu_custom_call.1} parent=1 // pred_check_branch
      %15 = sbr.rel (0) target = $region5
    $region4: #{tpu_custom_call.1} parent=1 // pred_region
      %17 = vsyncadd [#allocation4], 0
      %s18 = sshll.u32 %s0, 4
      %s19 = int_to_ptr.hbm [resolvable:$true] %s18
      %s20 = sshll.u32 [#allocation3], 4
      %s21 = int_to_ptr.vmem [resolvable:$true] %s20
      %26 = dma.hbm_to_vmem [thread:$0]  %s19, 512, %s21, [#allocation4], 128, 128, 8
    $region5: #{tpu_custom_call.1} parent=1 // pred_fallthru
      _
    // Predicated region
    $region6: #{tpu_custom_call.1} parent=1 // pred_check
      _
    $region7: #{tpu_custom_call.1} parent=1 // pred_check_branch
      %28 = sbr.rel (0) target = $region9
    $region8: #{tpu_custom_call.1} parent=1 // pred_region
      _
    $region9: #{tpu_custom_call.1} parent=1 // pred_fallthru
      _
    // Predicated region
    $region10: #{tpu_custom_call.1} parent=1 // pred_check
      _
    $region11: #{tpu_custom_call.1} parent=1 // pred_check_branch
      %30 = sbr.rel (0) target = $region13
    $region12: #{tpu_custom_call.1} parent=1 // pred_region
      _
    $region13: #{tpu_custom_call.1} parent=1 // pred_fallthru
      _
    // Predicated region
    $region14: #{tpu_custom_call.1} parent=1 // pred_check
      _
    $region15: #{tpu_custom_call.1} parent=1 // pred_check_branch
      %32 = sbr.rel (0) target = $region17
    $region16: #{tpu_custom_call.1} parent=1 // pred_region
      _
    $region17: #{tpu_custom_call.1} parent=1 // pred_fallthru
      _
    // Predicated region
    $region18: #{tpu_custom_call.1} parent=1 // pred_check
      _
    $region19: #{tpu_custom_call.1} parent=1 // pred_check_branch
      %34 = sbr.rel (0) target = $region21
    $region20: #{tpu_custom_call.1} parent=1 // pred_region
      _
    $region21: #{tpu_custom_call.1} parent=1 // pred_fallthru
      _
    // Predicated region
    $region22: #{tpu_custom_call.1} parent=1 // pred_check
      _
    $region23: #{tpu_custom_call.1} parent=1 // pred_check_branch
      %36 = sbr.rel (0) target = $region25
    $region24: #{tpu_custom_call.1} parent=1 // pred_region
      %38 = vsyncadd [#allocation7], 0
      %s39 = sshll.u32 %s5, 4
      %s40 = int_to_ptr.hbm [resolvable:$true] %s39
      %s41 = sshll.u32 [#allocation6], 4
      %s42 = int_to_ptr.vmem [resolvable:$true] %s41
      %47 = dma.hbm_to_vmem [thread:$0]  %s40, 1024, %s42, [#allocation7], 64, 64, 4
    $region25: #{tpu_custom_call.1} parent=1 // pred_fallthru
      _
    // Predicated region
    $region26: #{tpu_custom_call.1} parent=1 // pred_check
      _
    $region27: #{tpu_custom_call.1} parent=1 // pred_check_branch
      %49 = sbr.rel (0) target = $region29
    $region28: #{tpu_custom_call.1} parent=1 // pred_region
      %51 = dma.done [#allocation4], 512
    $region29: #{tpu_custom_call.1} parent=1 // pred_fallthru
      _
    // Predicated region
    $region30: #{tpu_custom_call.1} parent=1 // pred_check
      _
    $region31: #{tpu_custom_call.1} parent=1 // pred_check_branch
      %53 = sbr.rel (0) target = $region33
    $region32: #{tpu_custom_call.1} parent=1 // pred_region
      %55 = dma.done [#allocation7], 1024
    $region33: #{tpu_custom_call.1} parent=1 // pred_fallthru
      _
    %p56 = scmp.eq.s32.totalorder 0, 0
    // Predicated region
    $region34: #{tpu_custom_call.1} parent=1 // pred_check
      %p57 = pneg %p56
    $region35: #{tpu_custom_call.1} parent=1 // pred_check_branch
      %59 = sbr.rel (%p57) target = $region37
    $region36: #{tpu_custom_call.1} parent=1 // pred_region
      %60 = vst [vmem:[#allocation2] sm:$0xff] 0.0
      %61 = vst [vmem:[#allocation2 + $0x8] sm:$0xff] 0.0
      %62 = vst [vmem:[#allocation2 + $0x10] sm:$0xff] 0.0
      %63 = vst [vmem:[#allocation2 + $0x18] sm:$0xff] 0.0
      %64 = vst [vmem:[#allocation2 + $0x20] sm:$0xff] 0.0
      %65 = vst [vmem:[#allocation2 + $0x28] sm:$0xff] 0.0
      %66 = vst [vmem:[#allocation2 + $0x30] sm:$0xff] 0.0
      %67 = vst [vmem:[#allocation2 + $0x38] sm:$0xff] 0.0
      %68 = vst [vmem:[#allocation2 + $0x40] sm:$0xff] 0.0
      %69 = vst [vmem:[#allocation2 + $0x48] sm:$0xff] 0.0
      %70 = vst [vmem:[#allocation2 + $0x50] sm:$0xff] 0.0
      %71 = vst [vmem:[#allocation2 + $0x58] sm:$0xff] 0.0
      %72 = vst [vmem:[#allocation2 + $0x60] sm:$0xff] 0.0
      %73 = vst [vmem:[#allocation2 + $0x68] sm:$0xff] 0.0
      %74 = vst [vmem:[#allocation2 + $0x70] sm:$0xff] 0.0
      %75 = vst [vmem:[#allocation2 + $0x78] sm:$0xff] 0.0
    $region37: #{tpu_custom_call.1} parent=1 // pred_fallthru
      _
    %v76 = vld [vmem:[#allocation3] sm:$0xff]
    %v77 = vld [vmem:[#allocation3 + $0x8] sm:$0xff]
    %v78 = vld [vmem:[#allocation3 + $0x10] sm:$0xff]
    %v79 = vld [vmem:[#allocation3 + $0x18] sm:$0xff]
    %v80 = vunpack.c.0.s8 %v76
    %v81 = vunpack.c.1.s8 %v76
    %v82 = vunpack.c.2.s8 %v76
    %v83 = vunpack.c.3.s8 %v76
    %v84 = vunpack.c.0.s8 %v77
    %v85 = vunpack.c.1.s8 %v77
    %v86 = vunpack.c.2.s8 %v77
    %v87 = vunpack.c.3.s8 %v77
    %v88 = vunpack.c.0.s8 %v78
    %v89 = vunpack.c.1.s8 %v78
    %v90 = vunpack.c.2.s8 %v78
    %v91 = vunpack.c.3.s8 %v78
    %v92 = vunpack.c.0.s8 %v79
    %v93 = vunpack.c.1.s8 %v79
    %v94 = vunpack.c.2.s8 %v79
    %v95 = vunpack.c.3.s8 %v79
    %v96 = vcvt.s32.f32 %v80
    %v97 = vcvt.s32.f32 %v81
    %v98 = vcvt.s32.f32 %v82
    %v99 = vcvt.s32.f32 %v83
    %v100 = vcvt.s32.f32 %v84
    %v101 = vcvt.s32.f32 %v85
    %v102 = vcvt.s32.f32 %v86
    %v103 = vcvt.s32.f32 %v87
    %v104 = vcvt.s32.f32 %v88
    %v105 = vcvt.s32.f32 %v89
    %v106 = vcvt.s32.f32 %v90
    %v107 = vcvt.s32.f32 %v91
    %v108 = vcvt.s32.f32 %v92
    %v109 = vcvt.s32.f32 %v93
    %v110 = vcvt.s32.f32 %v94
    %v111 = vcvt.s32.f32 %v95
    %v112 = vpack.c.bf16 %v97, %v96
    %v113 = vpack.c.bf16 %v99, %v98
    %v114 = vpack.c.bf16 %v101, %v100
    %v115 = vpack.c.bf16 %v103, %v102
    %v116 = vpack.c.bf16 %v105, %v104
    %v117 = vpack.c.bf16 %v107, %v106
    %v118 = vpack.c.bf16 %v109, %v108
    %v119 = vpack.c.bf16 %v111, %v110
    %v120 = vld [vmem:[#allocation2] sm:$0xff]
    %v121 = vld [vmem:[#allocation2 + $0x8] sm:$0xff]
    %v122 = vld [vmem:[#allocation2 + $0x10] sm:$0xff]
    %v123 = vld [vmem:[#allocation2 + $0x18] sm:$0xff]
    %v124 = vld [vmem:[#allocation2 + $0x20] sm:$0xff]
    %v125 = vld [vmem:[#allocation2 + $0x28] sm:$0xff]
    %v126 = vld [vmem:[#allocation2 + $0x30] sm:$0xff]
    %v127 = vld [vmem:[#allocation2 + $0x38] sm:$0xff]
    %v128 = vld [vmem:[#allocation2 + $0x40] sm:$0xff]
    %v129 = vld [vmem:[#allocation2 + $0x48] sm:$0xff]
    %v130 = vld [vmem:[#allocation2 + $0x50] sm:$0xff]
    %v131 = vld [vmem:[#allocation2 + $0x58] sm:$0xff]
    %v132 = vld [vmem:[#allocation2 + $0x60] sm:$0xff]
    %v133 = vld [vmem:[#allocation2 + $0x68] sm:$0xff]
    %v134 = vld [vmem:[#allocation2 + $0x70] sm:$0xff]
    %v135 = vld [vmem:[#allocation2 + $0x78] sm:$0xff]
    %v136 = vld [vmem:[%s1] sm:$0xf]
    %v137 = vld [vmem:[%s1 + $0x4] sm:$0xf]
    %v138 = vld [vmem:[%s1 + $0x8] sm:$0xf]
    %v139 = vld [vmem:[%s1 + $0xc] sm:$0xf]
    %v140 = vld [vmem:[%s1 + $0x10] sm:$0xf]
    %v141 = vld [vmem:[%s1 + $0x14] sm:$0xf]
    %v142 = vld [vmem:[%s1 + $0x18] sm:$0xf]
    %v143 = vld [vmem:[%s1 + $0x1c] sm:$0xf]
    %v144 = vld [vmem:[%s1 + $0x20] sm:$0xf]
    %v145 = vld [vmem:[%s1 + $0x24] sm:$0xf]
    %v146 = vld [vmem:[%s1 + $0x28] sm:$0xf]
    %v147 = vld [vmem:[%s1 + $0x2c] sm:$0xf]
    %v148 = vld [vmem:[%s1 + $0x30] sm:$0xf]
    %v149 = vld [vmem:[%s1 + $0x34] sm:$0xf]
    %v150 = vld [vmem:[%s1 + $0x38] sm:$0xf]
    %v151 = vld [vmem:[%s1 + $0x3c] sm:$0xf]
    %v168 = vunpack.c.l.b16 %v136
    %v169 = vunpack.c.l.b16 %v137
    %v170 = vunpack.c.l.b16 %v138
    %v171 = vunpack.c.l.b16 %v139
    %v172 = vunpack.c.l.b16 %v140
    %v173 = vunpack.c.l.b16 %v141
    %v174 = vunpack.c.l.b16 %v142
    %v175 = vunpack.c.l.b16 %v143
    %v176 = vunpack.c.l.b16 %v144
    %v177 = vunpack.c.l.b16 %v145
    %v178 = vunpack.c.l.b16 %v146
    %v179 = vunpack.c.l.b16 %v147
    %v180 = vunpack.c.l.b16 %v148
    %v181 = vunpack.c.l.b16 %v149
    %v182 = vunpack.c.l.b16 %v150
    %v183 = vunpack.c.l.b16 %v151
    %v184 = vpack.c.b16 %v169, %v168
    %v185 = vpack.c.b16 %v171, %v170
    %v186 = vpack.c.b16 %v173, %v172
    %v187 = vpack.c.b16 %v175, %v174
    %v188 = vpack.c.b16 %v177, %v176
    %v189 = vpack.c.b16 %v179, %v178
    %v190 = vpack.c.b16 %v181, %v180
    %v191 = vpack.c.b16 %v183, %v182
    %200 = vmatpush.bf16.msra.mxu0 %v191
    %201 = vmatpush.bf16.msra.mxu0 %v190
    %202 = vmatpush.bf16.msra.mxu0 %v189
    %203 = vmatpush.bf16.msra.mxu0 %v188
    %204 = vmatpush.bf16.msra.mxu0 %v187
    %205 = vmatpush.bf16.msra.mxu0 %v186
    %206 = vmatpush.bf16.msra.mxu0 %v185
    %207 = vmatpush.bf16.msra.mxu0 %v184
    %208 = vmatmul.bf16.gmra.mxu0 %v112
    %v209 = vpop.f32.mrf.mxu0
    %v210 = vadd.f32 0.0, %v209
    %v211 = vpop.f32.mrf.mxu0
    %v212 = vadd.f32 0.0, %v211
    %213 = vmatmul.bf16.gmra.mxu0 %v113
    %v214 = vpop.f32.mrf.mxu0
    %v215 = vadd.f32 0.0, %v214
    %v216 = vpop.f32.mrf.mxu0
    %v217 = vadd.f32 0.0, %v216
    %218 = vmatmul.bf16.gmra.mxu0 %v114
    %v219 = vpop.f32.mrf.mxu0
    %v220 = vadd.f32 0.0, %v219
    %v221 = vpop.f32.mrf.mxu0
    %v222 = vadd.f32 0.0, %v221
    %223 = vmatmul.bf16.gmra.mxu0 %v115
    %v224 = vpop.f32.mrf.mxu0
    %v225 = vadd.f32 0.0, %v224
    %v226 = vpop.f32.mrf.mxu0
    %v227 = vadd.f32 0.0, %v226
    %228 = vmatmul.bf16.gmra.mxu0 %v116
    %v229 = vpop.f32.mrf.mxu0
    %v230 = vadd.f32 0.0, %v229
    %v231 = vpop.f32.mrf.mxu0
    %v232 = vadd.f32 0.0, %v231
    %233 = vmatmul.bf16.gmra.mxu0 %v117
    %v234 = vpop.f32.mrf.mxu0
    %v235 = vadd.f32 0.0, %v234
    %v236 = vpop.f32.mrf.mxu0
    %v237 = vadd.f32 0.0, %v236
    %238 = vmatmul.bf16.gmra.mxu0 %v118
    %v239 = vpop.f32.mrf.mxu0
    %v240 = vadd.f32 0.0, %v239
    %v241 = vpop.f32.mrf.mxu0
    %v242 = vadd.f32 0.0, %v241
    %243 = vmatmul.bf16.gmra.mxu0 %v119
    %v244 = vpop.f32.mrf.mxu0
    %v245 = vadd.f32 0.0, %v244
    %v246 = vpop.f32.mrf.mxu0
    %v247 = vadd.f32 0.0, %v246
    %248 = vdwg.mxu0
    %v249 = vadd.f32 %v120, %v210
    %v250 = vadd.f32 %v121, %v212
    %v251 = vadd.f32 %v122, %v215
    %v252 = vadd.f32 %v123, %v217
    %v253 = vadd.f32 %v124, %v220
    %v254 = vadd.f32 %v125, %v222
    %v255 = vadd.f32 %v126, %v225
    %v256 = vadd.f32 %v127, %v227
    %v257 = vadd.f32 %v128, %v230
    %v258 = vadd.f32 %v129, %v232
    %v259 = vadd.f32 %v130, %v235
    %v260 = vadd.f32 %v131, %v237
    %v261 = vadd.f32 %v132, %v240
    %v262 = vadd.f32 %v133, %v242
    %v263 = vadd.f32 %v134, %v245
    %v264 = vadd.f32 %v135, %v247
    %265 = vst [vmem:[#allocation2] sm:$0xff] %v249
    %266 = vst [vmem:[#allocation2 + $0x8] sm:$0xff] %v250
    %267 = vst [vmem:[#allocation2 + $0x10] sm:$0xff] %v251
    %268 = vst [vmem:[#allocation2 + $0x18] sm:$0xff] %v252
    %269 = vst [vmem:[#allocation2 + $0x20] sm:$0xff] %v253
    %270 = vst [vmem:[#allocation2 + $0x28] sm:$0xff] %v254
    %271 = vst [vmem:[#allocation2 + $0x30] sm:$0xff] %v255
    %272 = vst [vmem:[#allocation2 + $0x38] sm:$0xff] %v256
    %273 = vst [vmem:[#allocation2 + $0x40] sm:$0xff] %v257
    %274 = vst [vmem:[#allocation2 + $0x48] sm:$0xff] %v258
    %275 = vst [vmem:[#allocation2 + $0x50] sm:$0xff] %v259
    %276 = vst [vmem:[#allocation2 + $0x58] sm:$0xff] %v260
    %277 = vst [vmem:[#allocation2 + $0x60] sm:$0xff] %v261
    %278 = vst [vmem:[#allocation2 + $0x68] sm:$0xff] %v262
    %279 = vst [vmem:[#allocation2 + $0x70] sm:$0xff] %v263
    %280 = vst [vmem:[#allocation2 + $0x78] sm:$0xff] %v264
    // Predicated region
    $region38: #{tpu_custom_call.1} parent=1 // pred_check
      %p281 = pneg %p56
    $region39: #{tpu_custom_call.1} parent=1 // pred_check_branch
      %283 = sbr.rel (%p281) target = $region41
    $region40: #{tpu_custom_call.1} parent=1 // pred_region
      %v284 = vld [vmem:[%s2] sm:$0xff]
      %v285 = vld [vmem:[%s2 + $0x8] sm:$0xff]
      %v286 = vld [vmem:[%s2 + $0x10] sm:$0xff]
      %v287 = vld [vmem:[%s2 + $0x18] sm:$0xff]
      %v288 = vld [vmem:[%s2 + $0x20] sm:$0xff]
      %v289 = vld [vmem:[%s2 + $0x28] sm:$0xff]
      %v290 = vld [vmem:[%s2 + $0x30] sm:$0xff]
      %v291 = vld [vmem:[%s2 + $0x38] sm:$0xff]
      %v292 = vld [vmem:[%s2 + $0x40] sm:$0xff]
      %v293 = vld [vmem:[%s2 + $0x48] sm:$0xff]
      %v294 = vld [vmem:[%s2 + $0x50] sm:$0xff]
      %v295 = vld [vmem:[%s2 + $0x58] sm:$0xff]
      %v296 = vld [vmem:[%s2 + $0x60] sm:$0xff]
      %v297 = vld [vmem:[%s2 + $0x68] sm:$0xff]
      %v298 = vld [vmem:[%s2 + $0x70] sm:$0xff]
      %v299 = vld [vmem:[%s2 + $0x78] sm:$0xff]
      %v300 = vld [vmem:[#allocation2] sm:$0xff]
      %v301 = vld [vmem:[#allocation2 + $0x8] sm:$0xff]
      %v302 = vld [vmem:[#allocation2 + $0x10] sm:$0xff]
      %v303 = vld [vmem:[#allocation2 + $0x18] sm:$0xff]
      %v304 = vld [vmem:[#allocation2 + $0x20] sm:$0xff]
      %v305 = vld [vmem:[#allocation2 + $0x28] sm:$0xff]
      %v306 = vld [vmem:[#allocation2 + $0x30] sm:$0xff]
      %v307 = vld [vmem:[#allocation2 + $0x38] sm:$0xff]
      %v308 = vld [vmem:[#allocation2 + $0x40] sm:$0xff]
      %v309 = vld [vmem:[#allocation2 + $0x48] sm:$0xff]
      %v310 = vld [vmem:[#allocation2 + $0x50] sm:$0xff]
      %v311 = vld [vmem:[#allocation2 + $0x58] sm:$0xff]
      %v312 = vld [vmem:[#allocation2 + $0x60] sm:$0xff]
      %v313 = vld [vmem:[#allocation2 + $0x68] sm:$0xff]
      %v314 = vld [vmem:[#allocation2 + $0x70] sm:$0xff]
      %v315 = vld [vmem:[#allocation2 + $0x78] sm:$0xff]
      %317 = vset.pattern.permute.xlu0 0
      %318 = vperm.xlu0 %317, %v284
      %v319 = vpop.permute.xlu0 %318
      %322 = vset.pattern.permute.xlu0 0
      %323 = vperm.xlu0 %322, %v285
      %v324 = vpop.permute.xlu0 %323
      %327 = vset.pattern.permute.xlu0 0
      %328 = vperm.xlu0 %327, %v286
      %v329 = vpop.permute.xlu0 %328
      %332 = vset.pattern.permute.xlu0 0
      %333 = vperm.xlu0 %332, %v287
      %v334 = vpop.permute.xlu0 %333
      %337 = vset.pattern.permute.xlu0 0
      %338 = vperm.xlu0 %337, %v288
      %v339 = vpop.permute.xlu0 %338
      %342 = vset.pattern.permute.xlu0 0
      %343 = vperm.xlu0 %342, %v289
      %v344 = vpop.permute.xlu0 %343
      %347 = vset.pattern.permute.xlu0 0
      %348 = vperm.xlu0 %347, %v290
      %v349 = vpop.permute.xlu0 %348
      %352 = vset.pattern.permute.xlu0 0
      %353 = vperm.xlu0 %352, %v291
      %v354 = vpop.permute.xlu0 %353
      %357 = vset.pattern.permute.xlu0 0
      %358 = vperm.xlu0 %357, %v292
      %v359 = vpop.permute.xlu0 %358
      %362 = vset.pattern.permute.xlu0 0
      %363 = vperm.xlu0 %362, %v293
      %v364 = vpop.permute.xlu0 %363
      %367 = vset.pattern.permute.xlu0 0
      %368 = vperm.xlu0 %367, %v294
      %v369 = vpop.permute.xlu0 %368
      %372 = vset.pattern.permute.xlu0 0
      %373 = vperm.xlu0 %372, %v295
      %v374 = vpop.permute.xlu0 %373
      %377 = vset.pattern.permute.xlu0 0
      %378 = vperm.xlu0 %377, %v296
      %v379 = vpop.permute.xlu0 %378
      %382 = vset.pattern.permute.xlu0 0
      %383 = vperm.xlu0 %382, %v297
      %v384 = vpop.permute.xlu0 %383
      %387 = vset.pattern.permute.xlu0 0
      %388 = vperm.xlu0 %387, %v298
      %v389 = vpop.permute.xlu0 %388
      %392 = vset.pattern.permute.xlu0 0
      %393 = vperm.xlu0 %392, %v299
      %v394 = vpop.permute.xlu0 %393
      %v396 = vmul.f32 %v319, %v300
      %v397 = vmul.f32 %v324, %v301
      %v398 = vmul.f32 %v329, %v302
      %v399 = vmul.f32 %v334, %v303
      %v400 = vmul.f32 %v339, %v304
      %v401 = vmul.f32 %v344, %v305
      %v402 = vmul.f32 %v349, %v306
      %v403 = vmul.f32 %v354, %v307
      %v404 = vmul.f32 %v359, %v308
      %v405 = vmul.f32 %v364, %v309
      %v406 = vmul.f32 %v369, %v310
      %v407 = vmul.f32 %v374, %v311
      %v408 = vmul.f32 %v379, %v312
      %v409 = vmul.f32 %v384, %v313
      %v410 = vmul.f32 %v389, %v314
      %v411 = vmul.f32 %v394, %v315
      %v412 = vpack.c.bf16 %v397, %v396
      %v413 = vpack.c.bf16 %v399, %v398
      %v414 = vpack.c.bf16 %v401, %v400
      %v415 = vpack.c.bf16 %v403, %v402
      %v416 = vpack.c.bf16 %v405, %v404
      %v417 = vpack.c.bf16 %v407, %v406
      %v418 = vpack.c.bf16 %v409, %v408
      %v419 = vpack.c.bf16 %v411, %v410
      %v420 = vld [vmem:[%s3] sm:$0xf]
      %v421 = vld [vmem:[%s3 + $0x4] sm:$0xf]
      %v422 = vld [vmem:[%s3 + $0x8] sm:$0xf]
      %v423 = vld [vmem:[%s3 + $0xc] sm:$0xf]
      %v424 = vld [vmem:[%s3 + $0x10] sm:$0xf]
      %v425 = vld [vmem:[%s3 + $0x14] sm:$0xf]
      %v426 = vld [vmem:[%s3 + $0x18] sm:$0xf]
      %v427 = vld [vmem:[%s3 + $0x1c] sm:$0xf]
      %v428 = vld [vmem:[%s3 + $0x20] sm:$0xf]
      %v429 = vld [vmem:[%s3 + $0x24] sm:$0xf]
      %v430 = vld [vmem:[%s3 + $0x28] sm:$0xf]
      %v431 = vld [vmem:[%s3 + $0x2c] sm:$0xf]
      %v432 = vld [vmem:[%s3 + $0x30] sm:$0xf]
      %v433 = vld [vmem:[%s3 + $0x34] sm:$0xf]
      %v434 = vld [vmem:[%s3 + $0x38] sm:$0xf]
      %v435 = vld [vmem:[%s3 + $0x3c] sm:$0xf]
      %v436 = vld [vmem:[%s4] sm:$0x1]
      %v438 = vperm.slane %v436, 0
      %v456 = vunpack.c.l.b16 %v420
      %v457 = vunpack.c.l.b16 %v421
      %v458 = vunpack.c.l.b16 %v422
      %v459 = vunpack.c.l.b16 %v423
      %v460 = vunpack.c.l.b16 %v424
      %v461 = vunpack.c.l.b16 %v425
      %v462 = vunpack.c.l.b16 %v426
      %v463 = vunpack.c.l.b16 %v427
      %v464 = vunpack.c.l.b16 %v428
      %v465 = vunpack.c.l.b16 %v429
      %v466 = vunpack.c.l.b16 %v430
      %v467 = vunpack.c.l.b16 %v431
      %v468 = vunpack.c.l.b16 %v432
      %v469 = vunpack.c.l.b16 %v433
      %v470 = vunpack.c.l.b16 %v434
      %v471 = vunpack.c.l.b16 %v435
      %v472 = vpack.c.b16 %v457, %v456
      %v473 = vpack.c.b16 %v459, %v458
      %v474 = vpack.c.b16 %v461, %v460
      %v475 = vpack.c.b16 %v463, %v462
      %v476 = vpack.c.b16 %v465, %v464
      %v477 = vpack.c.b16 %v467, %v466
      %v478 = vpack.c.b16 %v469, %v468
      %v479 = vpack.c.b16 %v471, %v470
      %488 = vmatpush.bf16.msra.mxu0 %v479
      %489 = vmatpush.bf16.msra.mxu0 %v478
      %490 = vmatpush.bf16.msra.mxu0 %v477
      %491 = vmatpush.bf16.msra.mxu0 %v476
      %492 = vmatpush.bf16.msra.mxu0 %v475
      %493 = vmatpush.bf16.msra.mxu0 %v474
      %494 = vmatpush.bf16.msra.mxu0 %v473
      %495 = vmatpush.bf16.msra.mxu0 %v472
      %496 = vmatmul.bf16.gmra.mxu0 %v412
      %v497 = vpop.f32.mrf.mxu0
      %v498 = vadd.f32 %v438, %v497
      %v499 = vpop.f32.mrf.mxu0
      %v500 = vadd.f32 %v438, %v499
      %501 = vmatmul.bf16.gmra.mxu0 %v413
      %v502 = vpop.f32.mrf.mxu0
      %v503 = vadd.f32 %v438, %v502
      %v504 = vpop.f32.mrf.mxu0
      %v505 = vadd.f32 %v438, %v504
      %506 = vmatmul.bf16.gmra.mxu0 %v414
      %v507 = vpop.f32.mrf.mxu0
      %v508 = vadd.f32 %v438, %v507
      %v509 = vpop.f32.mrf.mxu0
      %v510 = vadd.f32 %v438, %v509
      %511 = vmatmul.bf16.gmra.mxu0 %v415
      %v512 = vpop.f32.mrf.mxu0
      %v513 = vadd.f32 %v438, %v512
      %v514 = vpop.f32.mrf.mxu0
      %v515 = vadd.f32 %v438, %v514
      %516 = vmatmul.bf16.gmra.mxu0 %v416
      %v517 = vpop.f32.mrf.mxu0
      %v518 = vadd.f32 %v438, %v517
      %v519 = vpop.f32.mrf.mxu0
      %v520 = vadd.f32 %v438, %v519
      %521 = vmatmul.bf16.gmra.mxu0 %v417
      %v522 = vpop.f32.mrf.mxu0
      %v523 = vadd.f32 %v438, %v522
      %v524 = vpop.f32.mrf.mxu0
      %v525 = vadd.f32 %v438, %v524
      %526 = vmatmul.bf16.gmra.mxu0 %v418
      %v527 = vpop.f32.mrf.mxu0
      %v528 = vadd.f32 %v438, %v527
      %v529 = vpop.f32.mrf.mxu0
      %v530 = vadd.f32 %v438, %v529
      %531 = vmatmul.bf16.gmra.mxu0 %v419
      %v532 = vpop.f32.mrf.mxu0
      %v533 = vadd.f32 %v438, %v532
      %v534 = vpop.f32.mrf.mxu0
      %v535 = vadd.f32 %v438, %v534
      %536 = vdwg.mxu0
      %v537 = vmax.f32 %v498, 0.0
      %v538 = vmax.f32 %v500, 0.0
      %v539 = vmax.f32 %v503, 0.0
      %v540 = vmax.f32 %v505, 0.0
      %v541 = vmax.f32 %v508, 0.0
      %v542 = vmax.f32 %v510, 0.0
      %v543 = vmax.f32 %v513, 0.0
      %v544 = vmax.f32 %v515, 0.0
      %v545 = vmax.f32 %v518, 0.0
      %v546 = vmax.f32 %v520, 0.0
      %v547 = vmax.f32 %v523, 0.0
      %v548 = vmax.f32 %v525, 0.0
      %v549 = vmax.f32 %v528, 0.0
      %v550 = vmax.f32 %v530, 0.0
      %v551 = vmax.f32 %v533, 0.0
      %v552 = vmax.f32 %v535, 0.0
      %v553 = vmul.f32 %v319, %v537
      %v554 = vmul.f32 %v324, %v538
      %v555 = vmul.f32 %v329, %v539
      %v556 = vmul.f32 %v334, %v540
      %v557 = vmul.f32 %v339, %v541
      %v558 = vmul.f32 %v344, %v542
      %v559 = vmul.f32 %v349, %v543
      %v560 = vmul.f32 %v354, %v544
      %v561 = vmul.f32 %v359, %v545
      %v562 = vmul.f32 %v364, %v546
      %v563 = vmul.f32 %v369, %v547
      %v564 = vmul.f32 %v374, %v548
      %v565 = vmul.f32 %v379, %v549
      %v566 = vmul.f32 %v384, %v550
      %v567 = vmul.f32 %v389, %v551
      %v568 = vmul.f32 %v394, %v552
      %v569 = vpack.c.bf16 %v554, %v553
      %v570 = vpack.c.bf16 %v556, %v555
      %v571 = vpack.c.bf16 %v558, %v557
      %v572 = vpack.c.bf16 %v560, %v559
      %v573 = vpack.c.bf16 %v562, %v561
      %v574 = vpack.c.bf16 %v564, %v563
      %v575 = vpack.c.bf16 %v566, %v565
      %v576 = vpack.c.bf16 %v568, %v567
      %v577 = vld [vmem:[#allocation6] sm:$0xf]
      %v578 = vld [vmem:[#allocation6 + $0x4] sm:$0xf]
      %v579 = vld [vmem:[#allocation6 + $0x8] sm:$0xf]
      %v580 = vld [vmem:[#allocation6 + $0xc] sm:$0xf]
      %v581 = vld [vmem:[#allocation6 + $0x10] sm:$0xf]
      %v582 = vld [vmem:[#allocation6 + $0x14] sm:$0xf]
      %v583 = vld [vmem:[#allocation6 + $0x18] sm:$0xf]
      %v584 = vld [vmem:[#allocation6 + $0x1c] sm:$0xf]
      %v585 = vld [vmem:[#allocation6 + $0x20] sm:$0xf]
      %v586 = vld [vmem:[#allocation6 + $0x24] sm:$0xf]
      %v587 = vld [vmem:[#allocation6 + $0x28] sm:$0xf]
      %v588 = vld [vmem:[#allocation6 + $0x2c] sm:$0xf]
      %v589 = vld [vmem:[#allocation6 + $0x30] sm:$0xf]
      %v590 = vld [vmem:[#allocation6 + $0x34] sm:$0xf]
      %v591 = vld [vmem:[#allocation6 + $0x38] sm:$0xf]
      %v592 = vld [vmem:[#allocation6 + $0x3c] sm:$0xf]
      %v609 = vunpack.c.l.b16 %v577
      %v610 = vunpack.c.l.b16 %v578
      %v611 = vunpack.c.l.b16 %v579
      %v612 = vunpack.c.l.b16 %v580
      %v613 = vunpack.c.l.b16 %v581
      %v614 = vunpack.c.l.b16 %v582
      %v615 = vunpack.c.l.b16 %v583
      %v616 = vunpack.c.l.b16 %v584
      %v617 = vunpack.c.l.b16 %v585
      %v618 = vunpack.c.l.b16 %v586
      %v619 = vunpack.c.l.b16 %v587
      %v620 = vunpack.c.l.b16 %v588
      %v621 = vunpack.c.l.b16 %v589
      %v622 = vunpack.c.l.b16 %v590
      %v623 = vunpack.c.l.b16 %v591
      %v624 = vunpack.c.l.b16 %v592
      %v625 = vpack.c.b16 %v610, %v609
      %v626 = vpack.c.b16 %v612, %v611
      %v627 = vpack.c.b16 %v614, %v613
      %v628 = vpack.c.b16 %v616, %v615
      %v629 = vpack.c.b16 %v618, %v617
      %v630 = vpack.c.b16 %v620, %v619
      %v631 = vpack.c.b16 %v622, %v621
      %v632 = vpack.c.b16 %v624, %v623
      %641 = vmatpush.bf16.msra.mxu0 %v632
      %642 = vmatpush.bf16.msra.mxu0 %v631
      %643 = vmatpush.bf16.msra.mxu0 %v630
      %644 = vmatpush.bf16.msra.mxu0 %v629
      %645 = vmatpush.bf16.msra.mxu0 %v628
      %646 = vmatpush.bf16.msra.mxu0 %v627
      %647 = vmatpush.bf16.msra.mxu0 %v626
      %648 = vmatpush.bf16.msra.mxu0 %v625
      %649 = vmatmul.bf16.gmra.mxu0 %v569
      %v650 = vpop.f32.mrf.mxu0
      %v651 = vadd.f32 0.0, %v650
      %v652 = vpop.f32.mrf.mxu0
      %v653 = vadd.f32 0.0, %v652
      %654 = vmatmul.bf16.gmra.mxu0 %v570
      %v655 = vpop.f32.mrf.mxu0
      %v656 = vadd.f32 0.0, %v655
      %v657 = vpop.f32.mrf.mxu0
      %v658 = vadd.f32 0.0, %v657
      %659 = vmatmul.bf16.gmra.mxu0 %v571
      %v660 = vpop.f32.mrf.mxu0
      %v661 = vadd.f32 0.0, %v660
      %v662 = vpop.f32.mrf.mxu0
      %v663 = vadd.f32 0.0, %v662
      %664 = vmatmul.bf16.gmra.mxu0 %v572
      %v665 = vpop.f32.mrf.mxu0
      %v666 = vadd.f32 0.0, %v665
      %v667 = vpop.f32.mrf.mxu0
      %v668 = vadd.f32 0.0, %v667
      %669 = vmatmul.bf16.gmra.mxu0 %v573
      %v670 = vpop.f32.mrf.mxu0
      %v671 = vadd.f32 0.0, %v670
      %v672 = vpop.f32.mrf.mxu0
      %v673 = vadd.f32 0.0, %v672
      %674 = vmatmul.bf16.gmra.mxu0 %v574
      %v675 = vpop.f32.mrf.mxu0
      %v676 = vadd.f32 0.0, %v675
      %v677 = vpop.f32.mrf.mxu0
      %v678 = vadd.f32 0.0, %v677
      %679 = vmatmul.bf16.gmra.mxu0 %v575
      %v680 = vpop.f32.mrf.mxu0
      %v681 = vadd.f32 0.0, %v680
      %v682 = vpop.f32.mrf.mxu0
      %v683 = vadd.f32 0.0, %v682
      %684 = vmatmul.bf16.gmra.mxu0 %v576
      %v685 = vpop.f32.mrf.mxu0
      %v686 = vadd.f32 0.0, %v685
      %v687 = vpop.f32.mrf.mxu0
      %v688 = vadd.f32 0.0, %v687
      %689 = vdwg.mxu0
      %v690 = vpack.c.bf16 %v651, %v651
      %v691 = vpack.c.bf16 %v653, %v653
      %v692 = vpack.c.bf16 %v656, %v656
      %v693 = vpack.c.bf16 %v658, %v658
      %v694 = vpack.c.bf16 %v661, %v661
      %v695 = vpack.c.bf16 %v663, %v663
      %v696 = vpack.c.bf16 %v666, %v666
      %v697 = vpack.c.bf16 %v668, %v668
      %v698 = vpack.c.bf16 %v671, %v671
      %v699 = vpack.c.bf16 %v673, %v673
      %v700 = vpack.c.bf16 %v676, %v676
      %v701 = vpack.c.bf16 %v678, %v678
      %v702 = vpack.c.bf16 %v681, %v681
      %v703 = vpack.c.bf16 %v683, %v683
      %v704 = vpack.c.bf16 %v686, %v686
      %v705 = vpack.c.bf16 %v688, %v688
      %706 = vst [vmem:[#allocation8] sm:$0xf] %v690
      %707 = vst [vmem:[#allocation8 + $0x4] sm:$0xf] %v691
      %708 = vst [vmem:[#allocation8 + $0x8] sm:$0xf] %v692
      %709 = vst [vmem:[#allocation8 + $0xc] sm:$0xf] %v693
      %710 = vst [vmem:[#allocation8 + $0x10] sm:$0xf] %v694
      %711 = vst [vmem:[#allocation8 + $0x14] sm:$0xf] %v695
      %712 = vst [vmem:[#allocation8 + $0x18] sm:$0xf] %v696
      %713 = vst [vmem:[#allocation8 + $0x1c] sm:$0xf] %v697
      %714 = vst [vmem:[#allocation8 + $0x20] sm:$0xf] %v698
      %715 = vst [vmem:[#allocation8 + $0x24] sm:$0xf] %v699
      %716 = vst [vmem:[#allocation8 + $0x28] sm:$0xf] %v700
      %717 = vst [vmem:[#allocation8 + $0x2c] sm:$0xf] %v701
      %718 = vst [vmem:[#allocation8 + $0x30] sm:$0xf] %v702
      %719 = vst [vmem:[#allocation8 + $0x34] sm:$0xf] %v703
      %720 = vst [vmem:[#allocation8 + $0x38] sm:$0xf] %v704
      %721 = vst [vmem:[#allocation8 + $0x3c] sm:$0xf] %v705
    $region41: #{tpu_custom_call.1} parent=1 // pred_fallthru
      _
    // Predicated region
    $region42: #{tpu_custom_call.1} parent=1 // pred_check
      _
    $region43: #{tpu_custom_call.1} parent=1 // pred_check_branch
      %723 = sbr.rel (0) target = $region45
    $region44: #{tpu_custom_call.1} parent=1 // pred_region
      %725 = vsyncadd [#allocation5], 0
      %s726 = sshll.u32 [#allocation8], 4
      %s727 = int_to_ptr.vmem [resolvable:$true] %s726
      %s728 = sshll.u32 %s6, 4
      %s729 = int_to_ptr.hbm [resolvable:$true] %s728
      %734 = dma.vmem_to_hbm [thread:$0]  %s727, 1024, %s729, [#allocation5], 64, 64, 4
    $region45: #{tpu_custom_call.1} parent=1 // pred_fallthru
      _
    // Predicated region
    $region46: #{tpu_custom_call.1} parent=1 // pred_check
      _
    $region47: #{tpu_custom_call.1} parent=1 // pred_check_branch
      %736 = sbr.rel (0) target = $region49
    $region48: #{tpu_custom_call.1} parent=1 // pred_region
      %738 = dma.done [#allocation5], 1024
    $region49: #{tpu_custom_call.1} parent=1 // pred_fallthru
      _
    %739 = vsyncpa [#allocation4], 1
    %740 = vsyncpa [#allocation7], 1
    %741 = vsyncpa [#allocation5], 1

</llo_original>
